<compile_context>
chip_gen: v6e
topology: v6e:2x2x1
jax: 0.10.0
libtpu: 0.0.40
codegen_flags: <defaults>
</compile_context>

<pallas_src>
import jax
import jax.numpy as jnp
from jax.experimental import pallas as pl
from jax.experimental.pallas import tpu as pltpu

# ---- module hyper-parameters (match the PyTorch __init__) -------------------
NUM_KERNEL = 10
PAD = 50
KW = 2 * PAD          # conv kernel width = 100

ATTN_HID = 32
ENC_HID = 16          # hd['ENC_HID_SIZE']  -> enc feature = 2*ENC_HID = 32
DEC_HID = 32          # hd['DEC_HID_SIZE']
ENC_FEAT = 2 * ENC_HID


# -----------------------------------------------------------------------------
# Pallas kernel: BB batch rows per grid step; three MXU matmuls + softmax.
# -----------------------------------------------------------------------------
def attention_kernel(enc_ref,    # (BB, T*F)      flattened encoder features
                     ad_ref,     # (BB, T+AH)     [prev_alpha row | dec proj + enc bias]
                     mask_ref,   # (BB, T)
                     wenc_ref,   # (T*F, T*AH)    kron(I_T, Wenc^T)  (block-diagonal)
                     wad_ref,    # (T+AH, T*AH)   [Toeplitz conv weight ; tiled I_AH]
                     wseg_ref,   # (T*AH, T)      kron(I_T, w_score^T)
                     out_ref):   # (BB, T)        alpha, T lane-dense
    # encoder projection + (conv term + dec bias): two MXU matmuls, all in the
    # flat (BB, T*AH) layout -> no in-kernel reshapes/relayouts.
    acc = jnp.dot(enc_ref[...], wenc_ref[...], preferred_element_type=jnp.float32)
    acc = acc + jnp.dot(ad_ref[...], wad_ref[...], preferred_element_type=jnp.float32)
    h = jnp.tanh(acc)                                               # (BB, T*AH)

    # score projection: segment-reduce over each AH-group via one MXU matmul.
    scores = jnp.dot(h, wseg_ref[...], preferred_element_type=jnp.float32)  # (BB, T)

    # masked softmax over T (T on lanes); matches PyTorch op order:
    # max over un-masked scores, mask applied AFTER exp.
    m = jnp.max(scores, axis=-1, keepdims=True)                     # (BB, 1)
    e = jnp.exp(scores - m) * mask_ref[...]                         # (BB, T)
    denom = jnp.sum(e, axis=-1, keepdims=True)                      # (BB, 1)
    out_ref[...] = e * pl.reciprocal(denom, approx=False)


# -----------------------------------------------------------------------------
# Wrapper: cheap XLA-side weight prep + pallas_call.
# -----------------------------------------------------------------------------
def _round_up(x, m):
    return ((x + m - 1) // m) * m


def _build_weights(params, T):
    """Fold Conv1d/ConvToScore/HiddenEncToScore/CalcScore into 3 matmul weights.

    NOTE: these scale as O(T^2 * ATTN_HID); this path targets moderate T.
    In a real decoder loop they are constants and should be built once.
    """
    AH = ATTN_HID
    # pre-multiplied conv path weight: W_pc[k, a] = sum_o Wconv[o,k] * Wcts[a,o]
    w_pc = params["w_conv"].T @ params["w_cts"].T                      # (KW, AH)

    # banded Toeplitz: M[s, t*AH + a] = W_pc[s - t + PAD, a] inside the band
    s_idx = jnp.arange(T)[:, None]
    t_idx = jnp.arange(T)[None, :]
    k_idx = s_idx - t_idx + PAD                                        # (T, T)
    valid = (k_idx >= 0) & (k_idx < KW)
    m_toep = jnp.where(valid[..., None], w_pc[jnp.clip(k_idx, 0, KW - 1)], 0.0)
    m_toep = m_toep.reshape(T, T * AH)                                 # (T, T*AH)

    # dec-bias broadcast rows: D[a, t*AH + a'] = (a == a') for every t
    d_rep = jnp.tile(jnp.eye(AH, dtype=jnp.float32), (1, T))           # (AH, T*AH)
    w_ad = jnp.concatenate([m_toep, d_rep], axis=0)                    # (T+AH, T*AH)

    # block-diagonal encoder projection weight
    w_encblk = jnp.kron(jnp.eye(T, dtype=jnp.float32), params["w_enc"].T)  # (T*F, T*AH)

    # per-T-segment score reduction weight
    w_seg = jnp.kron(jnp.eye(T, dtype=jnp.float32), params["w_score"].T)   # (T*AH, T)
    return w_encblk, w_ad, w_seg


def attention_forward(enc_output, prev_dec_hidden, prev_alpha, mask, params,
                      *, block_b=128):
    B, T, F = enc_output.shape
    assert F == ENC_FEAT
    AH = ATTN_HID

    w_encblk, w_ad, w_seg = _build_weights(params, T)

    # dec projection + enc bias folded together (one tiny batched XLA matmul)
    decb = prev_dec_hidden @ params["w_dec"].T + params["b_enc"]       # (B, AH)
    # [alpha row | dec bias] -> one small matmul operand
    ad = jnp.concatenate([prev_alpha[:, 0, :], decb], axis=1)          # (B, T+AH)
    enc_flat = enc_output.reshape(B, T * F)                            # free reshape

    # batch blocking: BB multiple of 8 (sublane alignment).  With large B this
    # yields multiple "parallel" grid steps (shards across v7x's 2 TCs).
    BB = max(8, min(_round_up(block_b, 8), _round_up(B, 8)))
    nb = pl.cdiv(B, BB)
    Bp = nb * BB
    db = Bp - B

    enc_p = jnp.pad(enc_flat, ((0, db), (0, 0)))
    ad_p = jnp.pad(ad, ((0, db), (0, 0)))
    # pad mask rows with 1.0 so padded rows don't produce 0/0
    mask_p = jnp.pad(mask, ((0, db), (0, 0)), constant_values=1.0)

    full = lambda b: (0, 0)
    out = pl.pallas_call(
        attention_kernel,
        out_shape=jax.ShapeDtypeStruct((Bp, T), jnp.float32),
        grid_spec=pltpu.PrefetchScalarGridSpec(
            num_scalar_prefetch=0,
            grid=(nb,),
            in_specs=[
                pl.BlockSpec((BB, T * F), lambda b: (b, 0)),
                pl.BlockSpec((BB, T + AH), lambda b: (b, 0)),
                pl.BlockSpec((BB, T), lambda b: (b, 0)),
                pl.BlockSpec((T * F, T * AH), full),
                pl.BlockSpec((T + AH, T * AH), full),
                pl.BlockSpec((T * AH, T), full),
            ],
            out_specs=pl.BlockSpec((BB, T), lambda b: (b, 0)),
        ),
        compiler_params=pltpu.CompilerParams(
            dimension_semantics=("parallel",)),
    )(enc_p, ad_p, mask_p, w_encblk, w_ad, w_seg)

    # (Bp, T) -> (B, 1, T): alpha.unsqueeze(1) is just a free reshape
    return out[:B, None, :]


# -----------------------------------------------------------------------------
# Pure-JAX reference (follows the PyTorch op order).
# -----------------------------------------------------------------------------
def attention_reference(enc_output, prev_dec_hidden, prev_alpha, mask, params):
    B, T, _ = enc_output.shape
    x = prev_alpha[:, 0, :]
    x_pad = jnp.pad(x, ((0, 0), (PAD, PAD)))
    idx = jnp.arange(T)[:, None] + jnp.arange(KW)[None, :]
    patches = x_pad[:, idx]                                       # (B, T, KW)
    conv = jnp.einsum("btk,ok->bto", patches, params["w_conv"])   # (B, T, NK)
    prev_attn_e = conv @ params["w_cts"].T
    enc_e = enc_output @ params["w_enc"].T + params["b_enc"]
    dec_e = (prev_dec_hidden @ params["w_dec"].T)[:, None, :]
    h = jnp.tanh(enc_e + dec_e + prev_attn_e)
    e = (h @ params["w_score"].T)[..., 0]                         # (B, T)
    e_exp = jnp.exp(e - e.max(axis=1, keepdims=True)) * mask
    alpha = e_exp / e_exp.sum(axis=1, keepdims=True)
    return alpha[:, None, :]


# -----------------------------------------------------------------------------
if __name__ == "__main__":
    B, T = 6, 16
    key = jax.random.PRNGKey(0)
    keys = jax.random.split(key, 10)

    # deterministic synthetic parameters (shapes from the PyTorch __init__)
    params = {
        "w_conv":  0.05 * jax.random.normal(keys[0], (NUM_KERNEL, KW), jnp.float32),
        "w_cts":   0.05 * jax.random.normal(keys[1], (ATTN_HID, NUM_KERNEL), jnp.float32),
        "w_enc":   0.05 * jax.random.normal(keys[2], (ATTN_HID, ENC_FEAT), jnp.float32),
        "b_enc":   0.05 * jax.random.normal(keys[3], (ATTN_HID,), jnp.float32),
        "w_dec":   0.05 * jax.random.normal(keys[4], (ATTN_HID, DEC_HID), jnp.float32),
        "w_score": 0.05 * jax.random.normal(keys[5], (1, ATTN_HID), jnp.float32),
    }

    # deterministic inputs
    enc_output = jax.random.normal(keys[6], (B, T, ENC_FEAT), jnp.float32)
    prev_dec_hidden = jax.random.normal(keys[7], (B, DEC_HID), jnp.float32)
    prev_alpha_raw = jax.random.uniform(keys[8], (B, 1, T), jnp.float32)
    prev_alpha = prev_alpha_raw / prev_alpha_raw.sum(axis=-1, keepdims=True)

    lengths = jnp.array([T, T - 2, T - 5, T, T - 1, T - 7])
    mask = (jnp.arange(T)[None, :] < lengths[:, None]).astype(jnp.float32)  # (B, T)

    out = attention_forward(enc_output, prev_dec_hidden, prev_alpha, mask, params,
                            block_b=128)
    out = jax.block_until_ready(out)

    ref = attention_reference(enc_output, prev_dec_hidden, prev_alpha, mask, params)
    assert out.shape == (B, 1, T), out.shape
    assert jnp.allclose(out, ref, atol=5e-5, rtol=1e-4), \
        float(jnp.max(jnp.abs(out - ref)))

    print("KERNEL_OK")
</pallas_src>

<mosaic_0001>
module attributes {stable_mosaic.version = 11 : i64} {
  func.func @attention_kernel(%arg0: i32, %arg1: memref<8x512xf32, #tpu.memory_space<vmem>>, %arg2: memref<8x48xf32, #tpu.memory_space<vmem>>, %arg3: memref<8x16xf32, #tpu.memory_space<vmem>>, %arg4: memref<512x512xf32, #tpu.memory_space<vmem>>, %arg5: memref<48x512xf32, #tpu.memory_space<vmem>>, %arg6: memref<512x16xf32, #tpu.memory_space<vmem>>, %arg7: memref<8x16xf32, #tpu.memory_space<vmem>>) attributes {dimension_semantics = [#tpu.dimension_semantics<parallel>], iteration_bounds = array<i64: 1>, scalar_prefetch = 0 : i64, scratch_operands = 0 : i64, tpu.core_type = #tpu.core_type<tc>, window_params = [{transform_indices = @transform_0, window_bounds = array<i64: 8, 512>}, {transform_indices = @transform_1, window_bounds = array<i64: 8, 48>}, {transform_indices = @transform_2, window_bounds = array<i64: 8, 16>}, {pipeline_mode = #tpu.pipeline_mode<synchronous>, transform_indices = @transform_3, window_bounds = array<i64: 512, 512>}, {pipeline_mode = #tpu.pipeline_mode<synchronous>, transform_indices = @transform_4, window_bounds = array<i64: 48, 512>}, {pipeline_mode = #tpu.pipeline_mode<synchronous>, transform_indices = @transform_5, window_bounds = array<i64: 512, 16>}, {transform_indices = @transform_6, window_bounds = array<i64: 8, 16>}]} {
    %c0 = arith.constant 0 : index
    %c0_0 = arith.constant 0 : index
    %0 = vector.load %arg1[%c0, %c0_0] : memref<8x512xf32, #tpu.memory_space<vmem>>, vector<8x512xf32>
    %c0_1 = arith.constant 0 : index
    %c0_2 = arith.constant 0 : index
    %1 = vector.load %arg4[%c0_1, %c0_2] : memref<512x512xf32, #tpu.memory_space<vmem>>, vector<512x512xf32>
    %cst = arith.constant dense<0.000000e+00> : vector<8x512xf32>
    %2 = tpu.matmul %0, %1, %cst {dimension_numbers = #tpu.dot_dimension_numbers<[1], [0], [0], [1], [0, 0, 1, 1], [], []>} : vector<8x512xf32>, vector<512x512xf32>, vector<8x512xf32> -> vector<8x512xf32>
    %c0_3 = arith.constant 0 : index
    %c0_4 = arith.constant 0 : index
    %3 = vector.load %arg2[%c0_3, %c0_4] : memref<8x48xf32, #tpu.memory_space<vmem>>, vector<8x48xf32>
    %c0_5 = arith.constant 0 : index
    %c0_6 = arith.constant 0 : index
    %4 = vector.load %arg5[%c0_5, %c0_6] : memref<48x512xf32, #tpu.memory_space<vmem>>, vector<48x512xf32>
    %cst_7 = arith.constant dense<0.000000e+00> : vector<8x512xf32>
    %5 = tpu.matmul %3, %4, %cst_7 {dimension_numbers = #tpu.dot_dimension_numbers<[1], [0], [0], [1], [0, 0, 1, 1], [], []>} : vector<8x48xf32>, vector<48x512xf32>, vector<8x512xf32> -> vector<8x512xf32>
    %6 = arith.addf %2, %5 : vector<8x512xf32>
    %7 = math.tanh %6 : vector<8x512xf32>
    %c0_8 = arith.constant 0 : index
    %c0_9 = arith.constant 0 : index
    %8 = vector.load %arg6[%c0_8, %c0_9] : memref<512x16xf32, #tpu.memory_space<vmem>>, vector<512x16xf32>
    %cst_10 = arith.constant dense<0.000000e+00> : vector<8x16xf32>
    %9 = tpu.matmul %7, %8, %cst_10 {dimension_numbers = #tpu.dot_dimension_numbers<[1], [0], [0], [1], [0, 0, 1, 1], [], []>} : vector<8x512xf32>, vector<512x16xf32>, vector<8x16xf32> -> vector<8x16xf32>
    %cst_11 = arith.constant dense<0xFF800000> : vector<8xf32>
    %10 = vector.multi_reduction <maximumf>, %9, %cst_11 [1] : vector<8x16xf32> to vector<8xf32>
    %11 = vector.shape_cast %10 : vector<8xf32> to vector<8x1xf32>
    %12 = vector.broadcast %11 : vector<8x1xf32> to vector<8x16xf32>
    %13 = arith.subf %9, %12 : vector<8x16xf32>
    %14 = math.exp %13 : vector<8x16xf32>
    %c0_12 = arith.constant 0 : index
    %c0_13 = arith.constant 0 : index
    %15 = vector.load %arg3[%c0_12, %c0_13] : memref<8x16xf32, #tpu.memory_space<vmem>>, vector<8x16xf32>
    %16 = arith.mulf %14, %15 : vector<8x16xf32>
    %cst_14 = arith.constant dense<0.000000e+00> : vector<8xf32>
    %17 = vector.multi_reduction <add>, %16, %cst_14 [1] : vector<8x16xf32> to vector<8xf32>
    %18 = vector.shape_cast %17 : vector<8xf32> to vector<8x1xf32>
    %19 = tpu.reciprocal %18 : vector<8x1xf32> -> vector<8x1xf32>
    %20 = vector.broadcast %19 : vector<8x1xf32> to vector<8x16xf32>
    %21 = arith.mulf %16, %20 : vector<8x16xf32>
    %c0_15 = arith.constant 0 : index
    %c0_16 = arith.constant 0 : index
    %22 = vector.load %arg7[%c0_15, %c0_16] : memref<8x16xf32, #tpu.memory_space<vmem>>, vector<8x16xf32>
    tpu.vector_store %arg7[%c0_15, %c0_16], %21 {strides = array<i32>} : memref<8x16xf32, #tpu.memory_space<vmem>>, vector<8x16xf32>,
    return
  }
  func.func @transform_0(%arg0: i32) -> (i32, i32) {
    %c0_i32 = arith.constant 0 : i32
    %c0_i32_0 = arith.constant 0 : i32
    return %arg0, %c0_i32 : i32, i32
  }
  func.func @transform_1(%arg0: i32) -> (i32, i32) {
    %c0_i32 = arith.constant 0 : i32
    %c0_i32_0 = arith.constant 0 : i32
    return %arg0, %c0_i32 : i32, i32
  }
  func.func @transform_2(%arg0: i32) -> (i32, i32) {
    %c0_i32 = arith.constant 0 : i32
    %c0_i32_0 = arith.constant 0 : i32
    return %arg0, %c0_i32 : i32, i32
  }
  func.func @transform_3(%arg0: i32) -> (i32, i32) {
    %c0_i32 = arith.constant 0 : i32
    %c0_i32_0 = arith.constant 0 : i32
    %c0_i32_1 = arith.constant 0 : i32
    return %c0_i32, %c0_i32_0 : i32, i32
  }
  func.func @transform_4(%arg0: i32) -> (i32, i32) {
    %c0_i32 = arith.constant 0 : i32
    %c0_i32_0 = arith.constant 0 : i32
    %c0_i32_1 = arith.constant 0 : i32
    return %c0_i32, %c0_i32_0 : i32, i32
  }
  func.func @transform_5(%arg0: i32) -> (i32, i32) {
    %c0_i32 = arith.constant 0 : i32
    %c0_i32_0 = arith.constant 0 : i32
    %c0_i32_1 = arith.constant 0 : i32
    return %c0_i32, %c0_i32_0 : i32, i32
  }
  func.func @transform_6(%arg0: i32) -> (i32, i32) {
    %c0_i32 = arith.constant 0 : i32
    %c0_i32_0 = arith.constant 0 : i32
    return %arg0, %c0_i32 : i32, i32
  }
}

</mosaic_0001>

<llo_original>
// kernel: tpu_custom_call.1
$region0: #{tpu_custom_call.1}
  #allocation0 [shape = 'u32[]', space=smem, size = 0x4, offset = 0x4, fixed_abs, tag = 'smem constant byte address 0x4 - core index']
  #allocation1 [shape = 'u32[144,128]{1,0:T(1,128)}', space=vmem, size = 0x12000, scoped, tag = 'internal scratch']
  %s0 = inlined_call_operand.vmem [shape: f32[8,512], index: 0, kind: input, shape index: {}]
  %s1 = inlined_call_operand.vmem [shape: f32[8,48], index: 1, kind: input, shape index: {}]
  %s2 = inlined_call_operand.vmem [shape: f32[8,16], index: 2, kind: input, shape index: {}]
  %s3 = inlined_call_operand.hbm [shape: f32[512,512], index: 3, kind: input, shape index: {}]
  %s4 = inlined_call_operand.vmem [shape: f32[48,512], index: 4, kind: input, shape index: {}]
  %s5 = inlined_call_operand.vmem [shape: f32[512,16], index: 5, kind: input, shape index: {}]
  %s6 = inlined_call_operand.hbm [shape: f32[8,16], index: 6, kind: output, shape index: {}]
  %s7 = sld [smem:[#allocation0]]
  $region38: #{tpu_custom_call.1} parent=0
    _
  %s9 = ssub.s32 1, %s7
  %s10 = scalar_select 0, %s9, %s7
  $region1: #{tpu_custom_call.1} parent=0
    #allocation2 [shape = 'u8[1048576]{0}', space=vmem, size = 0x100000, scoped, tag = 'input window, operand 3, single buffered']
    #allocation3 [shape = 's32[1]{0}', space=sflag, size = 0x4, scoped, tag = 'scoped memory for tpu_custom_call.1']
    #allocation4 [shape = 's32[1]{0}', space=sflag, size = 0x4, scoped, tag = 'scoped memory for tpu_custom_call.1']
    #allocation5 [shape = 'u8[4096]{0}', space=vmem, size = 0x1000, scoped, tag = 'output window, operand 0, single buffered']
    %11 = vsyncpa [#allocation3], 0
    %12 = vsyncpa [#allocation4], 0
    // Predicated region
    $region2: #{tpu_custom_call.1} parent=1 // pred_check
      _
    $region3: #{tpu_custom_call.1} parent=1 // pred_check_branch
      %14 = sbr.rel (0) target = $region5
    $region4: #{tpu_custom_call.1} parent=1 // pred_region
      _
    $region5: #{tpu_custom_call.1} parent=1 // pred_fallthru
      _
    // Predicated region
    $region6: #{tpu_custom_call.1} parent=1 // pred_check
      _
    $region7: #{tpu_custom_call.1} parent=1 // pred_check_branch
      %16 = sbr.rel (0) target = $region9
    $region8: #{tpu_custom_call.1} parent=1 // pred_region
      _
    $region9: #{tpu_custom_call.1} parent=1 // pred_fallthru
      _
    // Predicated region
    $region10: #{tpu_custom_call.1} parent=1 // pred_check
      _
    $region11: #{tpu_custom_call.1} parent=1 // pred_check_branch
      %18 = sbr.rel (0) target = $region13
    $region12: #{tpu_custom_call.1} parent=1 // pred_region
      _
    $region13: #{tpu_custom_call.1} parent=1 // pred_fallthru
      _
    // Predicated region
    $region14: #{tpu_custom_call.1} parent=1 // pred_check
      _
    $region15: #{tpu_custom_call.1} parent=1 // pred_check_branch
      %20 = sbr.rel (0) target = $region17
    $region16: #{tpu_custom_call.1} parent=1 // pred_region
      %s22 = ssub.s32 32768, 32768
      %23 = vsyncadd [#allocation3], %s22
      %s24 = sshll.u32 [#allocation2], 4
      %s25 = int_to_ptr.vmem [resolvable:$true] %s24
      %30 = dma.hbm_to_vmem [thread:$0]  %s3, 32768, %s25, [#allocation3], 512, 512, 32
    $region17: #{tpu_custom_call.1} parent=1 // pred_fallthru
      _
    // Predicated region
    $region18: #{tpu_custom_call.1} parent=1 // pred_check
      _
    $region19: #{tpu_custom_call.1} parent=1 // pred_check_branch
      %32 = sbr.rel (0) target = $region21
    $region20: #{tpu_custom_call.1} parent=1 // pred_region
      _
    $region21: #{tpu_custom_call.1} parent=1 // pred_fallthru
      _
    // Predicated region
    $region22: #{tpu_custom_call.1} parent=1 // pred_check
      _
    $region23: #{tpu_custom_call.1} parent=1 // pred_check_branch
      %34 = sbr.rel (0) target = $region25
    $region24: #{tpu_custom_call.1} parent=1 // pred_region
      _
    $region25: #{tpu_custom_call.1} parent=1 // pred_fallthru
      _
    // Predicated region
    $region26: #{tpu_custom_call.1} parent=1 // pred_check
      _
    $region27: #{tpu_custom_call.1} parent=1 // pred_check_branch
      %36 = sbr.rel (0) target = $region29
    $region28: #{tpu_custom_call.1} parent=1 // pred_region
      %37 = dma.done [#allocation3], 32768
    $region29: #{tpu_custom_call.1} parent=1 // pred_fallthru
      _
    %v38 = vld [vmem:[%s0] sm:$0xff]
    %v39 = vld [vmem:[%s0 + $0x8] sm:$0xff]
    %v40 = vld [vmem:[%s0 + $0x10] sm:$0xff]
    %v41 = vld [vmem:[%s0 + $0x18] sm:$0xff]
    %v42 = vld [vmem:[#allocation2] sm:$0xff]
    %v43 = vld [vmem:[#allocation2 + $0x8] sm:$0xff]
    %v44 = vld [vmem:[#allocation2 + $0x10] sm:$0xff]
    %v45 = vld [vmem:[#allocation2 + $0x18] sm:$0xff]
    %v46 = vld [vmem:[#allocation2 + $0x20] sm:$0xff]
    %v47 = vld [vmem:[#allocation2 + $0x28] sm:$0xff]
    %v48 = vld [vmem:[#allocation2 + $0x30] sm:$0xff]
    %v49 = vld [vmem:[#allocation2 + $0x38] sm:$0xff]
    %v50 = vld [vmem:[#allocation2 + $0x40] sm:$0xff]
    %v51 = vld [vmem:[#allocation2 + $0x48] sm:$0xff]
    %v52 = vld [vmem:[#allocation2 + $0x50] sm:$0xff]
    %v53 = vld [vmem:[#allocation2 + $0x58] sm:$0xff]
    %v54 = vld [vmem:[#allocation2 + $0x60] sm:$0xff]
    %v55 = vld [vmem:[#allocation2 + $0x68] sm:$0xff]
    %v56 = vld [vmem:[#allocation2 + $0x70] sm:$0xff]
    %v57 = vld [vmem:[#allocation2 + $0x78] sm:$0xff]
    %v58 = vld [vmem:[#allocation2 + $0x80] sm:$0xff]
    %v59 = vld [vmem:[#allocation2 + $0x88] sm:$0xff]
    %v60 = vld [vmem:[#allocation2 + $0x90] sm:$0xff]
    %v61 = vld [vmem:[#allocation2 + $0x98] sm:$0xff]
    %v62 = vld [vmem:[#allocation2 + $0xa0] sm:$0xff]
    %v63 = vld [vmem:[#allocation2 + $0xa8] sm:$0xff]
    %v64 = vld [vmem:[#allocation2 + $0xb0] sm:$0xff]
    %v65 = vld [vmem:[#allocation2 + $0xb8] sm:$0xff]
    %v66 = vld [vmem:[#allocation2 + $0xc0] sm:$0xff]
    %v67 = vld [vmem:[#allocation2 + $0xc8] sm:$0xff]
    %v68 = vld [vmem:[#allocation2 + $0xd0] sm:$0xff]
    %v69 = vld [vmem:[#allocation2 + $0xd8] sm:$0xff]
    %v70 = vld [vmem:[#allocation2 + $0xe0] sm:$0xff]
    %v71 = vld [vmem:[#allocation2 + $0xe8] sm:$0xff]
    %v72 = vld [vmem:[#allocation2 + $0xf0] sm:$0xff]
    %v73 = vld [vmem:[#allocation2 + $0xf8] sm:$0xff]
    %v74 = vld [vmem:[#allocation2 + $0x100] sm:$0xff]
    %v75 = vld [vmem:[#allocation2 + $0x108] sm:$0xff]
    %v76 = vld [vmem:[#allocation2 + $0x110] sm:$0xff]
    %v77 = vld [vmem:[#allocation2 + $0x118] sm:$0xff]
    %v78 = vld [vmem:[#allocation2 + $0x120] sm:$0xff]
    %v79 = vld [vmem:[#allocation2 + $0x128] sm:$0xff]
    %v80 = vld [vmem:[#allocation2 + $0x130] sm:$0xff]
    %v81 = vld [vmem:[#allocation2 + $0x138] sm:$0xff]
    %v82 = vld [vmem:[#allocation2 + $0x140] sm:$0xff]
    %v83 = vld [vmem:[#allocation2 + $0x148] sm:$0xff]
    %v84 = vld [vmem:[#allocation2 + $0x150] sm:$0xff]
    %v85 = vld [vmem:[#allocation2 + $0x158] sm:$0xff]
    %v86 = vld [vmem:[#allocation2 + $0x160] sm:$0xff]
    %v87 = vld [vmem:[#allocation2 + $0x168] sm:$0xff]
    %v88 = vld [vmem:[#allocation2 + $0x170] sm:$0xff]
    %v89 = vld [vmem:[#allocation2 + $0x178] sm:$0xff]
    %v90 = vld [vmem:[#allocation2 + $0x180] sm:$0xff]
    %v91 = vld [vmem:[#allocation2 + $0x188] sm:$0xff]
    %v92 = vld [vmem:[#allocation2 + $0x190] sm:$0xff]
    %v93 = vld [vmem:[#allocation2 + $0x198] sm:$0xff]
    %v94 = vld [vmem:[#allocation2 + $0x1a0] sm:$0xff]
    %v95 = vld [vmem:[#allocation2 + $0x1a8] sm:$0xff]
    %v96 = vld [vmem:[#allocation2 + $0x1b0] sm:$0xff]
    %v97 = vld [vmem:[#allocation2 + $0x1b8] sm:$0xff]
    %v98 = vld [vmem:[#allocation2 + $0x1c0] sm:$0xff]
    %v99 = vld [vmem:[#allocation2 + $0x1c8] sm:$0xff]
    %v100 = vld [vmem:[#allocation2 + $0x1d0] sm:$0xff]
    %v101 = vld [vmem:[#allocation2 + $0x1d8] sm:$0xff]
    %v102 = vld [vmem:[#allocation2 + $0x1e0] sm:$0xff]
    %v103 = vld [vmem:[#allocation2 + $0x1e8] sm:$0xff]
    %v104 = vld [vmem:[#allocation2 + $0x1f0] sm:$0xff]
    %v105 = vld [vmem:[#allocation2 + $0x1f8] sm:$0xff]
    %v106 = vld [vmem:[#allocation2 + $0x200] sm:$0xff]
    %v107 = vld [vmem:[#allocation2 + $0x208] sm:$0xff]
    %v108 = vld [vmem:[#allocation2 + $0x210] sm:$0xff]
    %v109 = vld [vmem:[#allocation2 + $0x218] sm:$0xff]
    %v110 = vld [vmem:[#allocation2 + $0x220] sm:$0xff]
    %v111 = vld [vmem:[#allocation2 + $0x228] sm:$0xff]
    %v112 = vld [vmem:[#allocation2 + $0x230] sm:$0xff]
    %v113 = vld [vmem:[#allocation2 + $0x238] sm:$0xff]
    %v114 = vld [vmem:[#allocation2 + $0x240] sm:$0xff]
    %v115 = vld [vmem:[#allocation2 + $0x248] sm:$0xff]
    %v116 = vld [vmem:[#allocation2 + $0x250] sm:$0xff]
    %v117 = vld [vmem:[#allocation2 + $0x258] sm:$0xff]
    %v118 = vld [vmem:[#allocation2 + $0x260] sm:$0xff]
    %v119 = vld [vmem:[#allocation2 + $0x268] sm:$0xff]
    %v120 = vld [vmem:[#allocation2 + $0x270] sm:$0xff]
    %v121 = vld [vmem:[#allocation2 + $0x278] sm:$0xff]
    %v122 = vld [vmem:[#allocation2 + $0x280] sm:$0xff]
    %v123 = vld [vmem:[#allocation2 + $0x288] sm:$0xff]
    %v124 = vld [vmem:[#allocation2 + $0x290] sm:$0xff]
    %v125 = vld [vmem:[#allocation2 + $0x298] sm:$0xff]
    %v126 = vld [vmem:[#allocation2 + $0x2a0] sm:$0xff]
    %v127 = vld [vmem:[#allocation2 + $0x2a8] sm:$0xff]
    %v128 = vld [vmem:[#allocation2 + $0x2b0] sm:$0xff]
    %v129 = vld [vmem:[#allocation2 + $0x2b8] sm:$0xff]
    %v130 = vld [vmem:[#allocation2 + $0x2c0] sm:$0xff]
    %v131 = vld [vmem:[#allocation2 + $0x2c8] sm:$0xff]
    %v132 = vld [vmem:[#allocation2 + $0x2d0] sm:$0xff]
    %v133 = vld [vmem:[#allocation2 + $0x2d8] sm:$0xff]
    %v134 = vld [vmem:[#allocation2 + $0x2e0] sm:$0xff]
    %v135 = vld [vmem:[#allocation2 + $0x2e8] sm:$0xff]
    %v136 = vld [vmem:[#allocation2 + $0x2f0] sm:$0xff]
    %v137 = vld [vmem:[#allocation2 + $0x2f8] sm:$0xff]
    %v138 = vld [vmem:[#allocation2 + $0x300] sm:$0xff]
    %v139 = vld [vmem:[#allocation2 + $0x308] sm:$0xff]
    %v140 = vld [vmem:[#allocation2 + $0x310] sm:$0xff]
    %v141 = vld [vmem:[#allocation2 + $0x318] sm:$0xff]
    %v142 = vld [vmem:[#allocation2 + $0x320] sm:$0xff]
    %v143 = vld [vmem:[#allocation2 + $0x328] sm:$0xff]
    %v144 = vld [vmem:[#allocation2 + $0x330] sm:$0xff]
    %v145 = vld [vmem:[#allocation2 + $0x338] sm:$0xff]
    %v146 = vld [vmem:[#allocation2 + $0x340] sm:$0xff]
    %v147 = vld [vmem:[#allocation2 + $0x348] sm:$0xff]
    %v148 = vld [vmem:[#allocation2 + $0x350] sm:$0xff]
    %v149 = vld [vmem:[#allocation2 + $0x358] sm:$0xff]
    %v150 = vld [vmem:[#allocation2 + $0x360] sm:$0xff]
    %v151 = vld [vmem:[#allocation2 + $0x368] sm:$0xff]
    %v152 = vld [vmem:[#allocation2 + $0x370] sm:$0xff]
    %v153 = vld [vmem:[#allocation2 + $0x378] sm:$0xff]
    %v154 = vld [vmem:[#allocation2 + $0x380] sm:$0xff]
    %v155 = vld [vmem:[#allocation2 + $0x388] sm:$0xff]
    %v156 = vld [vmem:[#allocation2 + $0x390] sm:$0xff]
    %v157 = vld [vmem:[#allocation2 + $0x398] sm:$0xff]
    %v158 = vld [vmem:[#allocation2 + $0x3a0] sm:$0xff]
    %v159 = vld [vmem:[#allocation2 + $0x3a8] sm:$0xff]
    %v160 = vld [vmem:[#allocation2 + $0x3b0] sm:$0xff]
    %v161 = vld [vmem:[#allocation2 + $0x3b8] sm:$0xff]
    %v162 = vld [vmem:[#allocation2 + $0x3c0] sm:$0xff]
    %v163 = vld [vmem:[#allocation2 + $0x3c8] sm:$0xff]
    %v164 = vld [vmem:[#allocation2 + $0x3d0] sm:$0xff]
    %v165 = vld [vmem:[#allocation2 + $0x3d8] sm:$0xff]
    %v166 = vld [vmem:[#allocation2 + $0x3e0] sm:$0xff]
    %v167 = vld [vmem:[#allocation2 + $0x3e8] sm:$0xff]
    %v168 = vld [vmem:[#allocation2 + $0x3f0] sm:$0xff]
    %v169 = vld [vmem:[#allocation2 + $0x3f8] sm:$0xff]
    %v170 = vld [vmem:[#allocation2 + $0x400] sm:$0xff]
    %v171 = vld [vmem:[#allocation2 + $0x408] sm:$0xff]
    %v172 = vld [vmem:[#allocation2 + $0x410] sm:$0xff]
    %v173 = vld [vmem:[#allocation2 + $0x418] sm:$0xff]
    %v174 = vld [vmem:[#allocation2 + $0x420] sm:$0xff]
    %v175 = vld [vmem:[#allocation2 + $0x428] sm:$0xff]
    %v176 = vld [vmem:[#allocation2 + $0x430] sm:$0xff]
    %v177 = vld [vmem:[#allocation2 + $0x438] sm:$0xff]
    %v178 = vld [vmem:[#allocation2 + $0x440] sm:$0xff]
    %v179 = vld [vmem:[#allocation2 + $0x448] sm:$0xff]
    %v180 = vld [vmem:[#allocation2 + $0x450] sm:$0xff]
    %v181 = vld [vmem:[#allocation2 + $0x458] sm:$0xff]
    %v182 = vld [vmem:[#allocation2 + $0x460] sm:$0xff]
    %v183 = vld [vmem:[#allocation2 + $0x468] sm:$0xff]
    %v184 = vld [vmem:[#allocation2 + $0x470] sm:$0xff]
    %v185 = vld [vmem:[#allocation2 + $0x478] sm:$0xff]
    %v186 = vld [vmem:[#allocation2 + $0x480] sm:$0xff]
    %v187 = vld [vmem:[#allocation2 + $0x488] sm:$0xff]
    %v188 = vld [vmem:[#allocation2 + $0x490] sm:$0xff]
    %v189 = vld [vmem:[#allocation2 + $0x498] sm:$0xff]
    %v190 = vld [vmem:[#allocation2 + $0x4a0] sm:$0xff]
    %v191 = vld [vmem:[#allocation2 + $0x4a8] sm:$0xff]
    %v192 = vld [vmem:[#allocation2 + $0x4b0] sm:$0xff]
    %v193 = vld [vmem:[#allocation2 + $0x4b8] sm:$0xff]
    %v194 = vld [vmem:[#allocation2 + $0x4c0] sm:$0xff]
    %v195 = vld [vmem:[#allocation2 + $0x4c8] sm:$0xff]
    %v196 = vld [vmem:[#allocation2 + $0x4d0] sm:$0xff]
    %v197 = vld [vmem:[#allocation2 + $0x4d8] sm:$0xff]
    %v198 = vld [vmem:[#allocation2 + $0x4e0] sm:$0xff]
    %v199 = vld [vmem:[#allocation2 + $0x4e8] sm:$0xff]
    %v200 = vld [vmem:[#allocation2 + $0x4f0] sm:$0xff]
    %v201 = vld [vmem:[#allocation2 + $0x4f8] sm:$0xff]
    %v202 = vld [vmem:[#allocation2 + $0x500] sm:$0xff]
    %v203 = vld [vmem:[#allocation2 + $0x508] sm:$0xff]
    %v204 = vld [vmem:[#allocation2 + $0x510] sm:$0xff]
    %v205 = vld [vmem:[#allocation2 + $0x518] sm:$0xff]
    %v206 = vld [vmem:[#allocation2 + $0x520] sm:$0xff]
    %v207 = vld [vmem:[#allocation2 + $0x528] sm:$0xff]
    %v208 = vld [vmem:[#allocation2 + $0x530] sm:$0xff]
    %v209 = vld [vmem:[#allocation2 + $0x538] sm:$0xff]
    %v210 = vld [vmem:[#allocation2 + $0x540] sm:$0xff]
    %v211 = vld [vmem:[#allocation2 + $0x548] sm:$0xff]
    %v212 = vld [vmem:[#allocation2 + $0x550] sm:$0xff]
    %v213 = vld [vmem:[#allocation2 + $0x558] sm:$0xff]
    %v214 = vld [vmem:[#allocation2 + $0x560] sm:$0xff]
    %v215 = vld [vmem:[#allocation2 + $0x568] sm:$0xff]
    %v216 = vld [vmem:[#allocation2 + $0x570] sm:$0xff]
    %v217 = vld [vmem:[#allocation2 + $0x578] sm:$0xff]
    %v218 = vld [vmem:[#allocation2 + $0x580] sm:$0xff]
    %v219 = vld [vmem:[#allocation2 + $0x588] sm:$0xff]
    %v220 = vld [vmem:[#allocation2 + $0x590] sm:$0xff]
    %v221 = vld [vmem:[#allocation2 + $0x598] sm:$0xff]
    %v222 = vld [vmem:[#allocation2 + $0x5a0] sm:$0xff]
    %v223 = vld [vmem:[#allocation2 + $0x5a8] sm:$0xff]
    %v224 = vld [vmem:[#allocation2 + $0x5b0] sm:$0xff]
    %v225 = vld [vmem:[#allocation2 + $0x5b8] sm:$0xff]
    %v226 = vld [vmem:[#allocation2 + $0x5c0] sm:$0xff]
    %v227 = vld [vmem:[#allocation2 + $0x5c8] sm:$0xff]
    %v228 = vld [vmem:[#allocation2 + $0x5d0] sm:$0xff]
    %v229 = vld [vmem:[#allocation2 + $0x5d8] sm:$0xff]
    %v230 = vld [vmem:[#allocation2 + $0x5e0] sm:$0xff]
    %v231 = vld [vmem:[#allocation2 + $0x5e8] sm:$0xff]
    %v232 = vld [vmem:[#allocation2 + $0x5f0] sm:$0xff]
    %v233 = vld [vmem:[#allocation2 + $0x5f8] sm:$0xff]
    %v234 = vld [vmem:[#allocation2 + $0x600] sm:$0xff]
    %v235 = vld [vmem:[#allocation2 + $0x608] sm:$0xff]
    %v236 = vld [vmem:[#allocation2 + $0x610] sm:$0xff]
    %v237 = vld [vmem:[#allocation2 + $0x618] sm:$0xff]
    %v238 = vld [vmem:[#allocation2 + $0x620] sm:$0xff]
    %v239 = vld [vmem:[#allocation2 + $0x628] sm:$0xff]
    %v240 = vld [vmem:[#allocation2 + $0x630] sm:$0xff]
    %v241 = vld [vmem:[#allocation2 + $0x638] sm:$0xff]
    %v242 = vld [vmem:[#allocation2 + $0x640] sm:$0xff]
    %v243 = vld [vmem:[#allocation2 + $0x648] sm:$0xff]
    %v244 = vld [vmem:[#allocation2 + $0x650] sm:$0xff]
    %v245 = vld [vmem:[#allocation2 + $0x658] sm:$0xff]
    %v246 = vld [vmem:[#allocation2 + $0x660] sm:$0xff]
    %v247 = vld [vmem:[#allocation2 + $0x668] sm:$0xff]
    %v248 = vld [vmem:[#allocation2 + $0x670] sm:$0xff]
    %v249 = vld [vmem:[#allocation2 + $0x678] sm:$0xff]
    %v250 = vld [vmem:[#allocation2 + $0x680] sm:$0xff]
    %v251 = vld [vmem:[#allocation2 + $0x688] sm:$0xff]
    %v252 = vld [vmem:[#allocation2 + $0x690] sm:$0xff]
    %v253 = vld [vmem:[#allocation2 + $0x698] sm:$0xff]
    %v254 = vld [vmem:[#allocation2 + $0x6a0] sm:$0xff]
    %v255 = vld [vmem:[#allocation2 + $0x6a8] sm:$0xff]
    %v256 = vld [vmem:[#allocation2 + $0x6b0] sm:$0xff]
    %v257 = vld [vmem:[#allocation2 + $0x6b8] sm:$0xff]
    %v258 = vld [vmem:[#allocation2 + $0x6c0] sm:$0xff]
    %v259 = vld [vmem:[#allocation2 + $0x6c8] sm:$0xff]
    %v260 = vld [vmem:[#allocation2 + $0x6d0] sm:$0xff]
    %v261 = vld [vmem:[#allocation2 + $0x6d8] sm:$0xff]
    %v262 = vld [vmem:[#allocation2 + $0x6e0] sm:$0xff]
    %v263 = vld [vmem:[#allocation2 + $0x6e8] sm:$0xff]
    %v264 = vld [vmem:[#allocation2 + $0x6f0] sm:$0xff]
    %v265 = vld [vmem:[#allocation2 + $0x6f8] sm:$0xff]
    %v266 = vld [vmem:[#allocation2 + $0x700] sm:$0xff]
    %v267 = vld [vmem:[#allocation2 + $0x708] sm:$0xff]
    %v268 = vld [vmem:[#allocation2 + $0x710] sm:$0xff]
    %v269 = vld [vmem:[#allocation2 + $0x718] sm:$0xff]
    %v270 = vld [vmem:[#allocation2 + $0x720] sm:$0xff]
    %v271 = vld [vmem:[#allocation2 + $0x728] sm:$0xff]
    %v272 = vld [vmem:[#allocation2 + $0x730] sm:$0xff]
    %v273 = vld [vmem:[#allocation2 + $0x738] sm:$0xff]
    %v274 = vld [vmem:[#allocation2 + $0x740] sm:$0xff]
    %v275 = vld [vmem:[#allocation2 + $0x748] sm:$0xff]
    %v276 = vld [vmem:[#allocation2 + $0x750] sm:$0xff]
    %v277 = vld [vmem:[#allocation2 + $0x758] sm:$0xff]
    %v278 = vld [vmem:[#allocation2 + $0x760] sm:$0xff]
    %v279 = vld [vmem:[#allocation2 + $0x768] sm:$0xff]
    %v280 = vld [vmem:[#allocation2 + $0x770] sm:$0xff]
    %v281 = vld [vmem:[#allocation2 + $0x778] sm:$0xff]
    %v282 = vld [vmem:[#allocation2 + $0x780] sm:$0xff]
    %v283 = vld [vmem:[#allocation2 + $0x788] sm:$0xff]
    %v284 = vld [vmem:[#allocation2 + $0x790] sm:$0xff]
    %v285 = vld [vmem:[#allocation2 + $0x798] sm:$0xff]
    %v286 = vld [vmem:[#allocation2 + $0x7a0] sm:$0xff]
    %v287 = vld [vmem:[#allocation2 + $0x7a8] sm:$0xff]
    %v288 = vld [vmem:[#allocation2 + $0x7b0] sm:$0xff]
    %v289 = vld [vmem:[#allocation2 + $0x7b8] sm:$0xff]
    %v290 = vld [vmem:[#allocation2 + $0x7c0] sm:$0xff]
    %v291 = vld [vmem:[#allocation2 + $0x7c8] sm:$0xff]
    %v292 = vld [vmem:[#allocation2 + $0x7d0] sm:$0xff]
    %v293 = vld [vmem:[#allocation2 + $0x7d8] sm:$0xff]
    %v294 = vld [vmem:[#allocation2 + $0x7e0] sm:$0xff]
    %v295 = vld [vmem:[#allocation2 + $0x7e8] sm:$0xff]
    %v296 = vld [vmem:[#allocation2 + $0x7f0] sm:$0xff]
    %v297 = vld [vmem:[#allocation2 + $0x7f8] sm:$0xff]
    %v298 = vld [vmem:[%s1] sm:$0xff]
    %v299 = vld [vmem:[%s4] sm:$0xff]
    %v300 = vld [vmem:[%s4 + $0x8] sm:$0xff]
    %v301 = vld [vmem:[%s4 + $0x10] sm:$0xff]
    %v302 = vld [vmem:[%s4 + $0x18] sm:$0xff]
    %v303 = vld [vmem:[%s4 + $0x20] sm:$0xff]
    %v304 = vld [vmem:[%s4 + $0x28] sm:$0xff]
    %v305 = vld [vmem:[%s4 + $0x30] sm:$0xff]
    %v306 = vld [vmem:[%s4 + $0x38] sm:$0xff]
    %v307 = vld [vmem:[%s4 + $0x40] sm:$0xff]
    %v308 = vld [vmem:[%s4 + $0x48] sm:$0xff]
    %v309 = vld [vmem:[%s4 + $0x50] sm:$0xff]
    %v310 = vld [vmem:[%s4 + $0x58] sm:$0xff]
    %v311 = vld [vmem:[%s4 + $0x60] sm:$0xff]
    %v312 = vld [vmem:[%s4 + $0x68] sm:$0xff]
    %v313 = vld [vmem:[%s4 + $0x70] sm:$0xff]
    %v314 = vld [vmem:[%s4 + $0x78] sm:$0xff]
    %v315 = vld [vmem:[%s4 + $0x80] sm:$0xff]
    %v316 = vld [vmem:[%s4 + $0x88] sm:$0xff]
    %v317 = vld [vmem:[%s4 + $0x90] sm:$0xff]
    %v318 = vld [vmem:[%s4 + $0x98] sm:$0xff]
    %v319 = vld [vmem:[%s4 + $0xa0] sm:$0xff]
    %v320 = vld [vmem:[%s4 + $0xa8] sm:$0xff]
    %v321 = vld [vmem:[%s4 + $0xb0] sm:$0xff]
    %v322 = vld [vmem:[%s4 + $0xb8] sm:$0xff]
    %vm323 = vcmask 392192
    %v325 = vsel %vm323, %v298, 0
    %327 = vmatprep.subr.mxu0 0.0
    %328 = vmatpush1.msra.mxu0 0.0
    %329 = vmatprep.subr.mxu0 0.0
    %330 = vmatpush1.msra.mxu0 0.0
    %331 = vmatprep.subr.mxu0 0.0
    %332 = vmatpush1.msra.mxu0 0.0
    %333 = vmatprep.subr.mxu0 0.0
    %334 = vmatpush1.msra.mxu0 0.0
    %335 = vmatprep.subr.mxu0 0.0
    %336 = vmatpush1.msra.mxu0 0.0
    %337 = vmatprep.subr.mxu0 0.0
    %338 = vmatpush1.msra.mxu0 0.0
    %339 = vmatprep.subr.mxu0 0.0
    %340 = vmatpush1.msra.mxu0 0.0
    %341 = vmatprep.subr.mxu0 0.0
    %342 = vmatpush1.msra.mxu0 0.0
    %343 = vmatprep.subr.mxu0 0.0
    %344 = vmatpush1.msra.mxu0 0.0
    %345 = vmatprep.subr.mxu0 0.0
    %346 = vmatpush1.msra.mxu0 0.0
    %347 = vmatprep.subr.mxu0 %v320
    %348 = vmatpush1.msra.mxu0 %v319
    %349 = vmatprep.subr.mxu0 %v316
    %350 = vmatpush1.msra.mxu0 %v315
    %351 = vmatprep.subr.mxu0 %v312
    %352 = vmatpush1.msra.mxu0 %v311
    %353 = vmatprep.subr.mxu0 %v308
    %354 = vmatpush1.msra.mxu0 %v307
    %355 = vmatprep.subr.mxu0 %v304
    %356 = vmatpush1.msra.mxu0 %v303
    %357 = vmatprep.subr.mxu0 %v300
    %358 = vmatpush1.msra.mxu0 %v299
    %359 = vmatprep.subr.mxu0 0.0
    %360 = vmatpush2.msra.mxu0 0.0
    %361 = vmatprep.subr.mxu0 0.0
    %362 = vmatpush2.msra.mxu0 0.0
    %363 = vmatprep.subr.mxu0 0.0
    %364 = vmatpush2.msra.mxu0 0.0
    %365 = vmatprep.subr.mxu0 0.0
    %366 = vmatpush2.msra.mxu0 0.0
    %367 = vmatprep.subr.mxu0 0.0
    %368 = vmatpush2.msra.mxu0 0.0
    %369 = vmatprep.subr.mxu0 0.0
    %370 = vmatpush2.msra.mxu0 0.0
    %371 = vmatprep.subr.mxu0 0.0
    %372 = vmatpush2.msra.mxu0 0.0
    %373 = vmatprep.subr.mxu0 0.0
    %374 = vmatpush2.msra.mxu0 0.0
    %375 = vmatprep.subr.mxu0 0.0
    %376 = vmatpush2.msra.mxu0 0.0
    %377 = vmatprep.subr.mxu0 0.0
    %378 = vmatpush2.msra.mxu0 0.0
    %379 = vmatprep.subr.mxu0 0.0
    %380 = vmatpush2.msra.mxu0 0.0
    %381 = vmatprep.subr.mxu0 0.0
    %382 = vmatpush2.msra.mxu0 0.0
    %383 = vmatprep.subr.mxu0 0.0
    %384 = vmatpush2.msra.mxu0 0.0
    %385 = vmatprep.subr.mxu0 0.0
    %386 = vmatpush2.msra.mxu0 0.0
    %387 = vmatprep.subr.mxu0 0.0
    %388 = vmatpush2.msra.mxu0 0.0
    %389 = vmatprep.subr.mxu0 0.0
    %390 = vmatpush2.msra.mxu0 0.0
    %391 = vmatprep.mubr.f32.mxu0 0.0
    %392 = vmatmul.mubr.f32.gmra.mxu0 %v325
    %v393 = vpop.f32.mrf.mxu0
    %v394 = vadd.f32 0.0, %v393
    %v395 = vpop.f32.mrf.mxu0
    %v396 = vadd.f32 0.0, %v395
    %397 = vdwg.mxu0
    %398 = vmatprep.subr.mxu0 0.0
    %399 = vmatpush1.msra.mxu0 0.0
    %400 = vmatprep.subr.mxu0 0.0
    %401 = vmatpush1.msra.mxu0 0.0
    %402 = vmatprep.subr.mxu0 0.0
    %403 = vmatpush1.msra.mxu0 0.0
    %404 = vmatprep.subr.mxu0 0.0
    %405 = vmatpush1.msra.mxu0 0.0
    %406 = vmatprep.subr.mxu0 0.0
    %407 = vmatpush1.msra.mxu0 0.0
    %408 = vmatprep.subr.mxu0 0.0
    %409 = vmatpush1.msra.mxu0 0.0
    %410 = vmatprep.subr.mxu0 0.0
    %411 = vmatpush1.msra.mxu0 0.0
    %412 = vmatprep.subr.mxu0 0.0
    %413 = vmatpush1.msra.mxu0 0.0
    %414 = vmatprep.subr.mxu0 0.0
    %415 = vmatpush1.msra.mxu0 0.0
    %416 = vmatprep.subr.mxu0 0.0
    %417 = vmatpush1.msra.mxu0 0.0
    %418 = vmatprep.subr.mxu0 %v322
    %419 = vmatpush1.msra.mxu0 %v321
    %420 = vmatprep.subr.mxu0 %v318
    %421 = vmatpush1.msra.mxu0 %v317
    %422 = vmatprep.subr.mxu0 %v314
    %423 = vmatpush1.msra.mxu0 %v313
    %424 = vmatprep.subr.mxu0 %v310
    %425 = vmatpush1.msra.mxu0 %v309
    %426 = vmatprep.subr.mxu0 %v306
    %427 = vmatpush1.msra.mxu0 %v305
    %428 = vmatprep.subr.mxu0 %v302
    %429 = vmatpush1.msra.mxu0 %v301
    %430 = vmatprep.subr.mxu0 0.0
    %431 = vmatpush2.msra.mxu0 0.0
    %432 = vmatprep.subr.mxu0 0.0
    %433 = vmatpush2.msra.mxu0 0.0
    %434 = vmatprep.subr.mxu0 0.0
    %435 = vmatpush2.msra.mxu0 0.0
    %436 = vmatprep.subr.mxu0 0.0
    %437 = vmatpush2.msra.mxu0 0.0
    %438 = vmatprep.subr.mxu0 0.0
    %439 = vmatpush2.msra.mxu0 0.0
    %440 = vmatprep.subr.mxu0 0.0
    %441 = vmatpush2.msra.mxu0 0.0
    %442 = vmatprep.subr.mxu0 0.0
    %443 = vmatpush2.msra.mxu0 0.0
    %444 = vmatprep.subr.mxu0 0.0
    %445 = vmatpush2.msra.mxu0 0.0
    %446 = vmatprep.subr.mxu0 0.0
    %447 = vmatpush2.msra.mxu0 0.0
    %448 = vmatprep.subr.mxu0 0.0
    %449 = vmatpush2.msra.mxu0 0.0
    %450 = vmatprep.subr.mxu0 0.0
    %451 = vmatpush2.msra.mxu0 0.0
    %452 = vmatprep.subr.mxu0 0.0
    %453 = vmatpush2.msra.mxu0 0.0
    %454 = vmatprep.subr.mxu0 0.0
    %455 = vmatpush2.msra.mxu0 0.0
    %456 = vmatprep.subr.mxu0 0.0
    %457 = vmatpush2.msra.mxu0 0.0
    %458 = vmatprep.subr.mxu0 0.0
    %459 = vmatpush2.msra.mxu0 0.0
    %460 = vmatprep.subr.mxu0 0.0
    %461 = vmatpush2.msra.mxu0 0.0
    %462 = vmatprep.mubr.f32.mxu0 0.0
    %463 = vmatmul.mubr.f32.gmra.mxu0 %v325
    %v464 = vpop.f32.mrf.mxu0
    %v465 = vadd.f32 0.0, %v464
    %v466 = vpop.f32.mrf.mxu0
    %v467 = vadd.f32 0.0, %v466
    %468 = vdwg.mxu0
    %469 = vmatprep.subr.mxu0 %v103
    %470 = vmatpush1.msra.mxu0 %v102
    %471 = vmatprep.subr.mxu0 %v99
    %472 = vmatpush1.msra.mxu0 %v98
    %473 = vmatprep.subr.mxu0 %v95
    %474 = vmatpush1.msra.mxu0 %v94
    %475 = vmatprep.subr.mxu0 %v91
    %476 = vmatpush1.msra.mxu0 %v90
    %477 = vmatprep.subr.mxu0 %v87
    %478 = vmatpush1.msra.mxu0 %v86
    %479 = vmatprep.subr.mxu0 %v83
    %480 = vmatpush1.msra.mxu0 %v82
    %481 = vmatprep.subr.mxu0 %v79
    %482 = vmatpush1.msra.mxu0 %v78
    %483 = vmatprep.subr.mxu0 %v75
    %484 = vmatpush1.msra.mxu0 %v74
    %485 = vmatprep.subr.mxu0 %v71
    %486 = vmatpush1.msra.mxu0 %v70
    %487 = vmatprep.subr.mxu0 %v67
    %488 = vmatpush1.msra.mxu0 %v66
    %489 = vmatprep.subr.mxu0 %v63
    %490 = vmatpush1.msra.mxu0 %v62
    %491 = vmatprep.subr.mxu0 %v59
    %492 = vmatpush1.msra.mxu0 %v58
    %493 = vmatprep.subr.mxu0 %v55
    %494 = vmatpush1.msra.mxu0 %v54
    %495 = vmatprep.subr.mxu0 %v51
    %496 = vmatpush1.msra.mxu0 %v50
    %497 = vmatprep.subr.mxu0 %v47
    %498 = vmatpush1.msra.mxu0 %v46
    %499 = vmatprep.subr.mxu0 %v43
    %500 = vmatpush1.msra.mxu0 %v42
    %501 = vmatprep.subr.mxu0 %v167
    %502 = vmatpush2.msra.mxu0 %v166
    %503 = vmatprep.subr.mxu0 %v163
    %504 = vmatpush2.msra.mxu0 %v162
    %505 = vmatprep.subr.mxu0 %v159
    %506 = vmatpush2.msra.mxu0 %v158
    %507 = vmatprep.subr.mxu0 %v155
    %508 = vmatpush2.msra.mxu0 %v154
    %509 = vmatprep.subr.mxu0 %v151
    %510 = vmatpush2.msra.mxu0 %v150
    %511 = vmatprep.subr.mxu0 %v147
    %512 = vmatpush2.msra.mxu0 %v146
    %513 = vmatprep.subr.mxu0 %v143
    %514 = vmatpush2.msra.mxu0 %v142
    %515 = vmatprep.subr.mxu0 %v139
    %516 = vmatpush2.msra.mxu0 %v138
    %517 = vmatprep.subr.mxu0 %v135
    %518 = vmatpush2.msra.mxu0 %v134
    %519 = vmatprep.subr.mxu0 %v131
    %520 = vmatpush2.msra.mxu0 %v130
    %521 = vmatprep.subr.mxu0 %v127
    %522 = vmatpush2.msra.mxu0 %v126
    %523 = vmatprep.subr.mxu0 %v123
    %524 = vmatpush2.msra.mxu0 %v122
    %525 = vmatprep.subr.mxu0 %v119
    %526 = vmatpush2.msra.mxu0 %v118
    %527 = vmatprep.subr.mxu0 %v115
    %528 = vmatpush2.msra.mxu0 %v114
    %529 = vmatprep.subr.mxu0 %v111
    %530 = vmatpush2.msra.mxu0 %v110
    %531 = vmatprep.subr.mxu0 %v107
    %532 = vmatpush2.msra.mxu0 %v106
    %533 = vmatprep.mubr.f32.mxu0 %v39
    %534 = vmatmul.mubr.f32.gmra.mxu0 %v38
    %v535 = vpop.f32.mrf.mxu0
    %v536 = vadd.f32 %v394, %v535
    %v537 = vpop.f32.mrf.mxu0
    %v538 = vadd.f32 %v396, %v537
    %539 = vdwg.mxu0
    %540 = vmatprep.subr.mxu0 %v231
    %541 = vmatpush1.msra.mxu0 %v230
    %542 = vmatprep.subr.mxu0 %v227
    %543 = vmatpush1.msra.mxu0 %v226
    %544 = vmatprep.subr.mxu0 %v223
    %545 = vmatpush1.msra.mxu0 %v222
    %546 = vmatprep.subr.mxu0 %v219
    %547 = vmatpush1.msra.mxu0 %v218
    %548 = vmatprep.subr.mxu0 %v215
    %549 = vmatpush1.msra.mxu0 %v214
    %550 = vmatprep.subr.mxu0 %v211
    %551 = vmatpush1.msra.mxu0 %v210
    %552 = vmatprep.subr.mxu0 %v207
    %553 = vmatpush1.msra.mxu0 %v206
    %554 = vmatprep.subr.mxu0 %v203
    %555 = vmatpush1.msra.mxu0 %v202
    %556 = vmatprep.subr.mxu0 %v199
    %557 = vmatpush1.msra.mxu0 %v198
    %558 = vmatprep.subr.mxu0 %v195
    %559 = vmatpush1.msra.mxu0 %v194
    %560 = vmatprep.subr.mxu0 %v191
    %561 = vmatpush1.msra.mxu0 %v190
    %562 = vmatprep.subr.mxu0 %v187
    %563 = vmatpush1.msra.mxu0 %v186
    %564 = vmatprep.subr.mxu0 %v183
    %565 = vmatpush1.msra.mxu0 %v182
    %566 = vmatprep.subr.mxu0 %v179
    %567 = vmatpush1.msra.mxu0 %v178
    %568 = vmatprep.subr.mxu0 %v175
    %569 = vmatpush1.msra.mxu0 %v174
    %570 = vmatprep.subr.mxu0 %v171
    %571 = vmatpush1.msra.mxu0 %v170
    %572 = vmatprep.subr.mxu0 %v295
    %573 = vmatpush2.msra.mxu0 %v294
    %574 = vmatprep.subr.mxu0 %v291
    %575 = vmatpush2.msra.mxu0 %v290
    %576 = vmatprep.subr.mxu0 %v287
    %577 = vmatpush2.msra.mxu0 %v286
    %578 = vmatprep.subr.mxu0 %v283
    %579 = vmatpush2.msra.mxu0 %v282
    %580 = vmatprep.subr.mxu0 %v279
    %581 = vmatpush2.msra.mxu0 %v278
    %582 = vmatprep.subr.mxu0 %v275
    %583 = vmatpush2.msra.mxu0 %v274
    %584 = vmatprep.subr.mxu0 %v271
    %585 = vmatpush2.msra.mxu0 %v270
    %586 = vmatprep.subr.mxu0 %v267
    %587 = vmatpush2.msra.mxu0 %v266
    %588 = vmatprep.subr.mxu0 %v263
    %589 = vmatpush2.msra.mxu0 %v262
    %590 = vmatprep.subr.mxu0 %v259
    %591 = vmatpush2.msra.mxu0 %v258
    %592 = vmatprep.subr.mxu0 %v255
    %593 = vmatpush2.msra.mxu0 %v254
    %594 = vmatprep.subr.mxu0 %v251
    %595 = vmatpush2.msra.mxu0 %v250
    %596 = vmatprep.subr.mxu0 %v247
    %597 = vmatpush2.msra.mxu0 %v246
    %598 = vmatprep.subr.mxu0 %v243
    %599 = vmatpush2.msra.mxu0 %v242
    %600 = vmatprep.subr.mxu0 %v239
    %601 = vmatpush2.msra.mxu0 %v238
    %602 = vmatprep.subr.mxu0 %v235
    %603 = vmatpush2.msra.mxu0 %v234
    %604 = vmatprep.mubr.f32.mxu0 %v41
    %605 = vmatmul.mubr.f32.gmra.mxu0 %v40
    %v606 = vpop.f32.mrf.mxu0
    %v607 = vadd.f32 %v536, %v606
    %v608 = vpop.f32.mrf.mxu0
    %v609 = vadd.f32 %v538, %v608
    %610 = vdwg.mxu0
    %611 = vmatprep.subr.mxu0 %v105
    %612 = vmatpush1.msra.mxu0 %v104
    %613 = vmatprep.subr.mxu0 %v101
    %614 = vmatpush1.msra.mxu0 %v100
    %615 = vmatprep.subr.mxu0 %v97
    %616 = vmatpush1.msra.mxu0 %v96
    %617 = vmatprep.subr.mxu0 %v93
    %618 = vmatpush1.msra.mxu0 %v92
    %619 = vmatprep.subr.mxu0 %v89
    %620 = vmatpush1.msra.mxu0 %v88
    %621 = vmatprep.subr.mxu0 %v85
    %622 = vmatpush1.msra.mxu0 %v84
    %623 = vmatprep.subr.mxu0 %v81
    %624 = vmatpush1.msra.mxu0 %v80
    %625 = vmatprep.subr.mxu0 %v77
    %626 = vmatpush1.msra.mxu0 %v76
    %627 = vmatprep.subr.mxu0 %v73
    %628 = vmatpush1.msra.mxu0 %v72
    %629 = vmatprep.subr.mxu0 %v69
    %630 = vmatpush1.msra.mxu0 %v68
    %631 = vmatprep.subr.mxu0 %v65
    %632 = vmatpush1.msra.mxu0 %v64
    %633 = vmatprep.subr.mxu0 %v61
    %634 = vmatpush1.msra.mxu0 %v60
    %635 = vmatprep.subr.mxu0 %v57
    %636 = vmatpush1.msra.mxu0 %v56
    %637 = vmatprep.subr.mxu0 %v53
    %638 = vmatpush1.msra.mxu0 %v52
    %639 = vmatprep.subr.mxu0 %v49
    %640 = vmatpush1.msra.mxu0 %v48
    %641 = vmatprep.subr.mxu0 %v45
    %642 = vmatpush1.msra.mxu0 %v44
    %643 = vmatprep.subr.mxu0 %v169
    %644 = vmatpush2.msra.mxu0 %v168
    %645 = vmatprep.subr.mxu0 %v165
    %646 = vmatpush2.msra.mxu0 %v164
    %647 = vmatprep.subr.mxu0 %v161
    %648 = vmatpush2.msra.mxu0 %v160
    %649 = vmatprep.subr.mxu0 %v157
    %650 = vmatpush2.msra.mxu0 %v156
    %651 = vmatprep.subr.mxu0 %v153
    %652 = vmatpush2.msra.mxu0 %v152
    %653 = vmatprep.subr.mxu0 %v149
    %654 = vmatpush2.msra.mxu0 %v148
    %655 = vmatprep.subr.mxu0 %v145
    %656 = vmatpush2.msra.mxu0 %v144
    %657 = vmatprep.subr.mxu0 %v141
    %658 = vmatpush2.msra.mxu0 %v140
    %659 = vmatprep.subr.mxu0 %v137
    %660 = vmatpush2.msra.mxu0 %v136
    %661 = vmatprep.subr.mxu0 %v133
    %662 = vmatpush2.msra.mxu0 %v132
    %663 = vmatprep.subr.mxu0 %v129
    %664 = vmatpush2.msra.mxu0 %v128
    %665 = vmatprep.subr.mxu0 %v125
    %666 = vmatpush2.msra.mxu0 %v124
    %667 = vmatprep.subr.mxu0 %v121
    %668 = vmatpush2.msra.mxu0 %v120
    %669 = vmatprep.subr.mxu0 %v117
    %670 = vmatpush2.msra.mxu0 %v116
    %671 = vmatprep.subr.mxu0 %v113
    %672 = vmatpush2.msra.mxu0 %v112
    %673 = vmatprep.subr.mxu0 %v109
    %674 = vmatpush2.msra.mxu0 %v108
    %675 = vmatprep.mubr.f32.mxu0 %v39
    %676 = vmatmul.mubr.f32.gmra.mxu0 %v38
    %v677 = vpop.f32.mrf.mxu0
    %v678 = vadd.f32 %v465, %v677
    %v679 = vpop.f32.mrf.mxu0
    %v680 = vadd.f32 %v467, %v679
    %681 = vdwg.mxu0
    %682 = vmatprep.subr.mxu0 %v233
    %683 = vmatpush1.msra.mxu0 %v232
    %684 = vmatprep.subr.mxu0 %v229
    %685 = vmatpush1.msra.mxu0 %v228
    %686 = vmatprep.subr.mxu0 %v225
    %687 = vmatpush1.msra.mxu0 %v224
    %688 = vmatprep.subr.mxu0 %v221
    %689 = vmatpush1.msra.mxu0 %v220
    %690 = vmatprep.subr.mxu0 %v217
    %691 = vmatpush1.msra.mxu0 %v216
    %692 = vmatprep.subr.mxu0 %v213
    %693 = vmatpush1.msra.mxu0 %v212
    %694 = vmatprep.subr.mxu0 %v209
    %695 = vmatpush1.msra.mxu0 %v208
    %696 = vmatprep.subr.mxu0 %v205
    %697 = vmatpush1.msra.mxu0 %v204
    %698 = vmatprep.subr.mxu0 %v201
    %699 = vmatpush1.msra.mxu0 %v200
    %700 = vmatprep.subr.mxu0 %v197
    %701 = vmatpush1.msra.mxu0 %v196
    %702 = vmatprep.subr.mxu0 %v193
    %703 = vmatpush1.msra.mxu0 %v192
    %704 = vmatprep.subr.mxu0 %v189
    %705 = vmatpush1.msra.mxu0 %v188
    %706 = vmatprep.subr.mxu0 %v185
    %707 = vmatpush1.msra.mxu0 %v184
    %708 = vmatprep.subr.mxu0 %v181
    %709 = vmatpush1.msra.mxu0 %v180
    %710 = vmatprep.subr.mxu0 %v177
    %711 = vmatpush1.msra.mxu0 %v176
    %712 = vmatprep.subr.mxu0 %v173
    %713 = vmatpush1.msra.mxu0 %v172
    %714 = vmatprep.subr.mxu0 %v297
    %715 = vmatpush2.msra.mxu0 %v296
    %716 = vmatprep.subr.mxu0 %v293
    %717 = vmatpush2.msra.mxu0 %v292
    %718 = vmatprep.subr.mxu0 %v289
    %719 = vmatpush2.msra.mxu0 %v288
    %720 = vmatprep.subr.mxu0 %v285
    %721 = vmatpush2.msra.mxu0 %v284
    %722 = vmatprep.subr.mxu0 %v281
    %723 = vmatpush2.msra.mxu0 %v280
    %724 = vmatprep.subr.mxu0 %v277
    %725 = vmatpush2.msra.mxu0 %v276
    %726 = vmatprep.subr.mxu0 %v273
    %727 = vmatpush2.msra.mxu0 %v272
    %728 = vmatprep.subr.mxu0 %v269
    %729 = vmatpush2.msra.mxu0 %v268
    %730 = vmatprep.subr.mxu0 %v265
    %731 = vmatpush2.msra.mxu0 %v264
    %732 = vmatprep.subr.mxu0 %v261
    %733 = vmatpush2.msra.mxu0 %v260
    %734 = vmatprep.subr.mxu0 %v257
    %735 = vmatpush2.msra.mxu0 %v256
    %736 = vmatprep.subr.mxu0 %v253
    %737 = vmatpush2.msra.mxu0 %v252
    %738 = vmatprep.subr.mxu0 %v249
    %739 = vmatpush2.msra.mxu0 %v248
    %740 = vmatprep.subr.mxu0 %v245
    %741 = vmatpush2.msra.mxu0 %v244
    %742 = vmatprep.subr.mxu0 %v241
    %743 = vmatpush2.msra.mxu0 %v240
    %744 = vmatprep.subr.mxu0 %v237
    %745 = vmatpush2.msra.mxu0 %v236
    %746 = vmatprep.mubr.f32.mxu0 %v41
    %747 = vmatmul.mubr.f32.gmra.mxu0 %v40
    %v748 = vpop.f32.mrf.mxu0
    %v749 = vadd.f32 %v678, %v748
    %v750 = vpop.f32.mrf.mxu0
    %v751 = vadd.f32 %v680, %v750
    %752 = vdwg.mxu0
    %v753 = vtanh.pop %v607
    %v754 = vtanh.pop %v609
    %v755 = vtanh.pop %v749
    %v756 = vtanh.pop %v751
    %v757 = vld [vmem:[%s5] sm:$0xff]
    %v758 = vld [vmem:[%s5 + $0x8] sm:$0xff]
    %v759 = vld [vmem:[%s5 + $0x10] sm:$0xff]
    %v760 = vld [vmem:[%s5 + $0x18] sm:$0xff]
    %v761 = vld [vmem:[%s5 + $0x20] sm:$0xff]
    %v762 = vld [vmem:[%s5 + $0x28] sm:$0xff]
    %v763 = vld [vmem:[%s5 + $0x30] sm:$0xff]
    %v764 = vld [vmem:[%s5 + $0x38] sm:$0xff]
    %v765 = vld [vmem:[%s5 + $0x40] sm:$0xff]
    %v766 = vld [vmem:[%s5 + $0x48] sm:$0xff]
    %v767 = vld [vmem:[%s5 + $0x50] sm:$0xff]
    %v768 = vld [vmem:[%s5 + $0x58] sm:$0xff]
    %v769 = vld [vmem:[%s5 + $0x60] sm:$0xff]
    %v770 = vld [vmem:[%s5 + $0x68] sm:$0xff]
    %v771 = vld [vmem:[%s5 + $0x70] sm:$0xff]
    %v772 = vld [vmem:[%s5 + $0x78] sm:$0xff]
    %v773 = vld [vmem:[%s5 + $0x80] sm:$0xff]
    %v774 = vld [vmem:[%s5 + $0x88] sm:$0xff]
    %v775 = vld [vmem:[%s5 + $0x90] sm:$0xff]
    %v776 = vld [vmem:[%s5 + $0x98] sm:$0xff]
    %v777 = vld [vmem:[%s5 + $0xa0] sm:$0xff]
    %v778 = vld [vmem:[%s5 + $0xa8] sm:$0xff]
    %v779 = vld [vmem:[%s5 + $0xb0] sm:$0xff]
    %v780 = vld [vmem:[%s5 + $0xb8] sm:$0xff]
    %v781 = vld [vmem:[%s5 + $0xc0] sm:$0xff]
    %v782 = vld [vmem:[%s5 + $0xc8] sm:$0xff]
    %v783 = vld [vmem:[%s5 + $0xd0] sm:$0xff]
    %v784 = vld [vmem:[%s5 + $0xd8] sm:$0xff]
    %v785 = vld [vmem:[%s5 + $0xe0] sm:$0xff]
    %v786 = vld [vmem:[%s5 + $0xe8] sm:$0xff]
    %v787 = vld [vmem:[%s5 + $0xf0] sm:$0xff]
    %v788 = vld [vmem:[%s5 + $0xf8] sm:$0xff]
    %v789 = vld [vmem:[%s5 + $0x100] sm:$0xff]
    %v790 = vld [vmem:[%s5 + $0x108] sm:$0xff]
    %v791 = vld [vmem:[%s5 + $0x110] sm:$0xff]
    %v792 = vld [vmem:[%s5 + $0x118] sm:$0xff]
    %v793 = vld [vmem:[%s5 + $0x120] sm:$0xff]
    %v794 = vld [vmem:[%s5 + $0x128] sm:$0xff]
    %v795 = vld [vmem:[%s5 + $0x130] sm:$0xff]
    %v796 = vld [vmem:[%s5 + $0x138] sm:$0xff]
    %v797 = vld [vmem:[%s5 + $0x140] sm:$0xff]
    %v798 = vld [vmem:[%s5 + $0x148] sm:$0xff]
    %v799 = vld [vmem:[%s5 + $0x150] sm:$0xff]
    %v800 = vld [vmem:[%s5 + $0x158] sm:$0xff]
    %v801 = vld [vmem:[%s5 + $0x160] sm:$0xff]
    %v802 = vld [vmem:[%s5 + $0x168] sm:$0xff]
    %v803 = vld [vmem:[%s5 + $0x170] sm:$0xff]
    %v804 = vld [vmem:[%s5 + $0x178] sm:$0xff]
    %v805 = vld [vmem:[%s5 + $0x180] sm:$0xff]
    %v806 = vld [vmem:[%s5 + $0x188] sm:$0xff]
    %v807 = vld [vmem:[%s5 + $0x190] sm:$0xff]
    %v808 = vld [vmem:[%s5 + $0x198] sm:$0xff]
    %v809 = vld [vmem:[%s5 + $0x1a0] sm:$0xff]
    %v810 = vld [vmem:[%s5 + $0x1a8] sm:$0xff]
    %v811 = vld [vmem:[%s5 + $0x1b0] sm:$0xff]
    %v812 = vld [vmem:[%s5 + $0x1b8] sm:$0xff]
    %v813 = vld [vmem:[%s5 + $0x1c0] sm:$0xff]
    %v814 = vld [vmem:[%s5 + $0x1c8] sm:$0xff]
    %v815 = vld [vmem:[%s5 + $0x1d0] sm:$0xff]
    %v816 = vld [vmem:[%s5 + $0x1d8] sm:$0xff]
    %v817 = vld [vmem:[%s5 + $0x1e0] sm:$0xff]
    %v818 = vld [vmem:[%s5 + $0x1e8] sm:$0xff]
    %v819 = vld [vmem:[%s5 + $0x1f0] sm:$0xff]
    %v820 = vld [vmem:[%s5 + $0x1f8] sm:$0xff]
    %821 = vmatprep.subr.mxu0 0.0
    %822 = vmatpush1.msra.mxu0 %v772
    %823 = vmatprep.subr.mxu0 0.0
    %824 = vmatpush1.msra.mxu0 %v771
    %825 = vmatprep.subr.mxu0 0.0
    %826 = vmatpush1.msra.mxu0 %v770
    %827 = vmatprep.subr.mxu0 0.0
    %828 = vmatpush1.msra.mxu0 %v769
    %829 = vmatprep.subr.mxu0 0.0
    %830 = vmatpush1.msra.mxu0 %v768
    %831 = vmatprep.subr.mxu0 0.0
    %832 = vmatpush1.msra.mxu0 %v767
    %833 = vmatprep.subr.mxu0 0.0
    %834 = vmatpush1.msra.mxu0 %v766
    %835 = vmatprep.subr.mxu0 0.0
    %836 = vmatpush1.msra.mxu0 %v765
    %837 = vmatprep.subr.mxu0 0.0
    %838 = vmatpush1.msra.mxu0 %v764
    %839 = vmatprep.subr.mxu0 0.0
    %840 = vmatpush1.msra.mxu0 %v763
    %841 = vmatprep.subr.mxu0 0.0
    %842 = vmatpush1.msra.mxu0 %v762
    %843 = vmatprep.subr.mxu0 0.0
    %844 = vmatpush1.msra.mxu0 %v761
    %845 = vmatprep.subr.mxu0 0.0
    %846 = vmatpush1.msra.mxu0 %v760
    %847 = vmatprep.subr.mxu0 0.0
    %848 = vmatpush1.msra.mxu0 %v759
    %849 = vmatprep.subr.mxu0 0.0
    %850 = vmatpush1.msra.mxu0 %v758
    %851 = vmatprep.subr.mxu0 0.0
    %852 = vmatpush1.msra.mxu0 %v757
    %853 = vmatprep.subr.mxu0 0.0
    %854 = vmatpush2.msra.mxu0 %v788
    %855 = vmatprep.subr.mxu0 0.0
    %856 = vmatpush2.msra.mxu0 %v787
    %857 = vmatprep.subr.mxu0 0.0
    %858 = vmatpush2.msra.mxu0 %v786
    %859 = vmatprep.subr.mxu0 0.0
    %860 = vmatpush2.msra.mxu0 %v785
    %861 = vmatprep.subr.mxu0 0.0
    %862 = vmatpush2.msra.mxu0 %v784
    %863 = vmatprep.subr.mxu0 0.0
    %864 = vmatpush2.msra.mxu0 %v783
    %865 = vmatprep.subr.mxu0 0.0
    %866 = vmatpush2.msra.mxu0 %v782
    %867 = vmatprep.subr.mxu0 0.0
    %868 = vmatpush2.msra.mxu0 %v781
    %869 = vmatprep.subr.mxu0 0.0
    %870 = vmatpush2.msra.mxu0 %v780
    %871 = vmatprep.subr.mxu0 0.0
    %872 = vmatpush2.msra.mxu0 %v779
    %873 = vmatprep.subr.mxu0 0.0
    %874 = vmatpush2.msra.mxu0 %v778
    %875 = vmatprep.subr.mxu0 0.0
    %876 = vmatpush2.msra.mxu0 %v777
    %877 = vmatprep.subr.mxu0 0.0
    %878 = vmatpush2.msra.mxu0 %v776
    %879 = vmatprep.subr.mxu0 0.0
    %880 = vmatpush2.msra.mxu0 %v775
    %881 = vmatprep.subr.mxu0 0.0
    %882 = vmatpush2.msra.mxu0 %v774
    %883 = vmatprep.subr.mxu0 0.0
    %884 = vmatpush2.msra.mxu0 %v773
    %885 = vmatprep.mubr.f32.mxu0 %v754
    %886 = vmatmul.mubr.f32.gmra.mxu0 %v753
    %v887 = vpop.f32.mrf.mxu0
    %v888 = vadd.f32 0.0, %v887
    %v889 = vpop.f32.mrf.mxu0
    %890 = vdwg.mxu0
    %891 = vmatprep.subr.mxu0 0.0
    %892 = vmatpush1.msra.mxu0 %v804
    %893 = vmatprep.subr.mxu0 0.0
    %894 = vmatpush1.msra.mxu0 %v803
    %895 = vmatprep.subr.mxu0 0.0
    %896 = vmatpush1.msra.mxu0 %v802
    %897 = vmatprep.subr.mxu0 0.0
    %898 = vmatpush1.msra.mxu0 %v801
    %899 = vmatprep.subr.mxu0 0.0
    %900 = vmatpush1.msra.mxu0 %v800
    %901 = vmatprep.subr.mxu0 0.0
    %902 = vmatpush1.msra.mxu0 %v799
    %903 = vmatprep.subr.mxu0 0.0
    %904 = vmatpush1.msra.mxu0 %v798
    %905 = vmatprep.subr.mxu0 0.0
    %906 = vmatpush1.msra.mxu0 %v797
    %907 = vmatprep.subr.mxu0 0.0
    %908 = vmatpush1.msra.mxu0 %v796
    %909 = vmatprep.subr.mxu0 0.0
    %910 = vmatpush1.msra.mxu0 %v795
    %911 = vmatprep.subr.mxu0 0.0
    %912 = vmatpush1.msra.mxu0 %v794
    %913 = vmatprep.subr.mxu0 0.0
    %914 = vmatpush1.msra.mxu0 %v793
    %915 = vmatprep.subr.mxu0 0.0
    %916 = vmatpush1.msra.mxu0 %v792
    %917 = vmatprep.subr.mxu0 0.0
    %918 = vmatpush1.msra.mxu0 %v791
    %919 = vmatprep.subr.mxu0 0.0
    %920 = vmatpush1.msra.mxu0 %v790
    %921 = vmatprep.subr.mxu0 0.0
    %922 = vmatpush1.msra.mxu0 %v789
    %923 = vmatprep.subr.mxu0 0.0
    %924 = vmatpush2.msra.mxu0 %v820
    %925 = vmatprep.subr.mxu0 0.0
    %926 = vmatpush2.msra.mxu0 %v819
    %927 = vmatprep.subr.mxu0 0.0
    %928 = vmatpush2.msra.mxu0 %v818
    %929 = vmatprep.subr.mxu0 0.0
    %930 = vmatpush2.msra.mxu0 %v817
    %931 = vmatprep.subr.mxu0 0.0
    %932 = vmatpush2.msra.mxu0 %v816
    %933 = vmatprep.subr.mxu0 0.0
    %934 = vmatpush2.msra.mxu0 %v815
    %935 = vmatprep.subr.mxu0 0.0
    %936 = vmatpush2.msra.mxu0 %v814
    %937 = vmatprep.subr.mxu0 0.0
    %938 = vmatpush2.msra.mxu0 %v813
    %939 = vmatprep.subr.mxu0 0.0
    %940 = vmatpush2.msra.mxu0 %v812
    %941 = vmatprep.subr.mxu0 0.0
    %942 = vmatpush2.msra.mxu0 %v811
    %943 = vmatprep.subr.mxu0 0.0
    %944 = vmatpush2.msra.mxu0 %v810
    %945 = vmatprep.subr.mxu0 0.0
    %946 = vmatpush2.msra.mxu0 %v809
    %947 = vmatprep.subr.mxu0 0.0
    %948 = vmatpush2.msra.mxu0 %v808
    %949 = vmatprep.subr.mxu0 0.0
    %950 = vmatpush2.msra.mxu0 %v807
    %951 = vmatprep.subr.mxu0 0.0
    %952 = vmatpush2.msra.mxu0 %v806
    %953 = vmatprep.subr.mxu0 0.0
    %954 = vmatpush2.msra.mxu0 %v805
    %955 = vmatprep.mubr.f32.mxu0 %v756
    %956 = vmatmul.mubr.f32.gmra.mxu0 %v755
    %v957 = vpop.f32.mrf.mxu0
    %v958 = vadd.f32 %v888, %v957
    %v959 = vpop.f32.mrf.mxu0
    %960 = vdwg.mxu0
    %vm961 = vcmask 130048
    %v962 = vsel %vm961, %v958, -inf
    %963 = vmax.xlane.f32.xlu0 %v962
    %v964 = vpop.xlane.xlu0 %963
    %v965 = vsub.f32 %v958, %v964
    %v966 = vmul.f32 %v965, 1.442695
    %v967 = vpow.pop %v966
    %v968 = vld [vmem:[%s2] sm:$0xff]
    %v969 = vmul.f32 %v967, %v968
    %v970 = vsel %vm961, %v969, 0.0
    %971 = vadd.xlane.f32.xlu0 %v970
    %v972 = vpop.xlane.xlu0 %971
    %v973 = vrcp.pop %v972
    %v974 = vmul.f32 %v969, %v973
    %975 = vst.msk [vmem:[#allocation5] sm:$0xff] %vm961, %v974
    // Predicated region
    $region30: #{tpu_custom_call.1} parent=1 // pred_check
      _
    $region31: #{tpu_custom_call.1} parent=1 // pred_check_branch
      %977 = sbr.rel (0) target = $region33
    $region32: #{tpu_custom_call.1} parent=1 // pred_region
      %s979 = ssub.s32 128, 128
      %980 = vsyncadd [#allocation4], %s979
      %s982 = sshll.u32 [#allocation5], 4
      %s983 = int_to_ptr.vmem [resolvable:$true] %s982
      %985 = dma.vmem_to_hbm [thread:$0]  %s983, 128, %s6, [#allocation4]
    $region33: #{tpu_custom_call.1} parent=1 // pred_fallthru
      _
    // Predicated region
    $region34: #{tpu_custom_call.1} parent=1 // pred_check
      _
    $region35: #{tpu_custom_call.1} parent=1 // pred_check_branch
      %987 = sbr.rel (0) target = $region37
    $region36: #{tpu_custom_call.1} parent=1 // pred_region
      %988 = dma.done [#allocation4], 128
    $region37: #{tpu_custom_call.1} parent=1 // pred_fallthru
      _
    %989 = vsyncpa [#allocation3], 1
    %990 = vsyncpa [#allocation4], 1

</llo_original>
